<compile_context>
chip_gen: v7x
topology: tpu7x:2x2x1
jax: 0.10.0
libtpu: 0.0.40
codegen_flags: <defaults>
</compile_context>

<pallas_src>
import functools

import jax
import jax.numpy as jnp
from jax.experimental import pallas as pl
from jax.experimental.pallas import tpu as pltpu


def _scale_objects_kernel(x_ref, o_ref, *, scale: float, d: int):
    x = x_ref[...]                                           # (tile_rows, n*d)
    lane = jax.lax.broadcasted_iota(jnp.int32, x.shape, dimension=x.ndim - 1)
    mult = jnp.where((lane % d) < 4, scale, 1.0).astype(x.dtype)
    o_ref[...] = x * mult


def _pick_tile_rows(b, lane_width, itemsize, tile_budget_bytes=2 * 1024 * 1024):
    """Rows per block: whole array if small; otherwise a multiple of 8 capped
    so a single tile stays <= ~2 MiB (double-buffered in + out ~= 4x tile
    bytes, comfortably inside v5e's 16 MiB / v7x's 32 MiB scoped VMEM)."""
    rows = tile_budget_bytes // max(1, lane_width * itemsize)
    rows = max(8, (rows // 8) * 8)
    rows = min(rows, 1024)
    if b <= rows:
        return b                      # full row axis: always a legal block
    return rows


def scale_objects(objects: jax.Array, scale: int = 4) -> jax.Array:
    """Pallas equivalent of ScaleObjects(scale).forward(objects)."""
    b, n, d = objects.shape
    lane_width = n * d
    x2 = objects.reshape(b, lane_width)        # lane-dense view (free)
    itemsize = jnp.dtype(objects.dtype).itemsize
    tile_rows = _pick_tile_rows(b, lane_width, itemsize)
    grid = (pl.cdiv(b, tile_rows),)

    kernel = functools.partial(_scale_objects_kernel, scale=float(scale), d=d)
    out2 = pl.pallas_call(
        kernel,
        out_shape=jax.ShapeDtypeStruct((b, lane_width), objects.dtype),
        grid=grid,
        in_specs=[pl.BlockSpec((tile_rows, lane_width), lambda i: (i, 0))],
        out_specs=pl.BlockSpec((tile_rows, lane_width), lambda i: (i, 0)),
        input_output_aliases={0: 0},
        compiler_params=pltpu.CompilerParams(
            dimension_semantics=("parallel",),
        ),
    )(x2)
    return out2.reshape(b, n, d)


if __name__ == "__main__":
    scale = 4

    # --- small shape matching the module's typical use ---------------------
    b, n, d6 = 2, 8, 6
    objects = jax.random.normal(jax.random.PRNGKey(0), (b, n, d6),
                                dtype=jnp.float32)
    ref = objects.at[:, :, :4].multiply(float(scale))   # pure-JAX reference
    out = jax.block_until_ready(scale_objects(objects, scale=scale))
    assert out.shape == objects.shape
    assert out.dtype == objects.dtype
    assert jnp.allclose(out, ref, atol=1e-6), "mismatch vs reference (small)"

    # --- larger shape to exercise the gridded / pipelined path -------------
    b2, n2 = 2048, 16
    objects2 = jax.random.normal(jax.random.PRNGKey(1), (b2, n2, d6),
                                 dtype=jnp.float32)
    ref2 = objects2.at[:, :, :4].multiply(float(scale))
    out2 = jax.block_until_ready(scale_objects(objects2, scale=scale))
    assert jnp.allclose(out2, ref2, atol=1e-6), "mismatch vs reference (large)"

    print("KERNEL_OK")
</pallas_src>

<mosaic_0001>
module attributes {stable_mosaic.version = 11 : i64} {
  func.func @_scale_objects_kernel(%arg0: i32, %arg1: memref<2x48xf32, #tpu.memory_space<vmem>>, %arg2: memref<2x48xf32, #tpu.memory_space<vmem>>) attributes {dimension_semantics = [#tpu.dimension_semantics<parallel>], iteration_bounds = array<i64: 1>, scalar_prefetch = 0 : i64, scratch_operands = 0 : i64, tpu.core_type = #tpu.core_type<tc>, window_params = [{transform_indices = @transform_0, window_bounds = array<i64: 2, 48>}, {transform_indices = @transform_1, window_bounds = array<i64: 2, 48>}]} {
    %c0 = arith.constant 0 : index
    %c0_0 = arith.constant 0 : index
    %0 = vector.load %arg1[%c0, %c0_0] : memref<2x48xf32, #tpu.memory_space<vmem>>, vector<2x48xf32>
    %1 = tpu.iota {dimensions = array<i32: 1>} : vector<2x48xi32>
    %c6_i32 = arith.constant 6 : i32
    %c0_i32 = arith.constant 0 : i32
    %2 = arith.cmpi eq, %c6_i32, %c0_i32 : i32
    %c1_i32 = arith.constant 1 : i32
    %3 = arith.select %2, %c1_i32, %c6_i32 : i32
    %4 = vector.broadcast %3 : i32 to vector<2x48xi32>
    %5 = arith.remsi %1, %4 : vector<2x48xi32>
    %c0_i32_1 = arith.constant 0 : i32
    %6 = vector.broadcast %c0_i32_1 : i32 to vector<2x48xi32>
    %7 = arith.cmpi ne, %5, %6 : vector<2x48xi32>
    %c0_i32_2 = arith.constant 0 : i32
    %8 = vector.broadcast %c0_i32_2 : i32 to vector<2x48xi32>
    %9 = arith.cmpi slt, %5, %8 : vector<2x48xi32>
    %c0_i32_3 = arith.constant 0 : i32
    %10 = arith.cmpi slt, %3, %c0_i32_3 : i32
    %11 = vector.broadcast %10 : i1 to vector<2x48xi1>
    %12 = vector.broadcast %11 : vector<2x48xi1> to vector<2x48xi1>
    %13 = arith.xori %9, %12 : vector<2x48xi1>
    %14 = arith.andi %13, %7 : vector<2x48xi1>
    %15 = vector.broadcast %3 : i32 to vector<2x48xi32>
    %16 = arith.addi %5, %15 : vector<2x48xi32>
    %17 = arith.select %14, %16, %5 : vector<2x48xi1>, vector<2x48xi32>
    %c4_i32 = arith.constant 4 : i32
    %18 = vector.broadcast %c4_i32 : i32 to vector<2x48xi32>
    %19 = arith.cmpi slt, %17, %18 : vector<2x48xi32>
    %cst = arith.constant 4.000000e+00 : f32
    %cst_4 = arith.constant 1.000000e+00 : f32
    %20 = vector.broadcast %cst : f32 to vector<2x48xf32>
    %21 = vector.broadcast %cst_4 : f32 to vector<2x48xf32>
    %22 = arith.select %19, %20, %21 : vector<2x48xi1>, vector<2x48xf32>
    %23 = arith.mulf %0, %22 : vector<2x48xf32>
    %c0_5 = arith.constant 0 : index
    %c0_6 = arith.constant 0 : index
    %24 = vector.load %arg2[%c0_5, %c0_6] : memref<2x48xf32, #tpu.memory_space<vmem>>, vector<2x48xf32>
    tpu.vector_store %arg2[%c0_5, %c0_6], %23 {strides = array<i32>} : memref<2x48xf32, #tpu.memory_space<vmem>>, vector<2x48xf32>,
    return
  }
  func.func @transform_0(%arg0: i32) -> (i32, i32) {
    %c0_i32 = arith.constant 0 : i32
    %c0_i32_0 = arith.constant 0 : i32
    return %arg0, %c0_i32 : i32, i32
  }
  func.func @transform_1(%arg0: i32) -> (i32, i32) {
    %c0_i32 = arith.constant 0 : i32
    %c0_i32_0 = arith.constant 0 : i32
    return %arg0, %c0_i32 : i32, i32
  }
}

</mosaic_0001>

<llo_original>
// kernel: tpu_custom_call.1
$region0: #{tpu_custom_call.1}
  #allocation0 [shape = 'u32[]', space=smem, size = 0x4, offset = 0x4, fixed_abs, tag = 'smem constant byte address 0x4 - core index']
  #allocation1 [shape = 'u32[144,128]{1,0:T(1,128)}', space=vmem, size = 0x12000, scoped, tag = 'internal scratch']
  %s0 = inlined_call_operand.hbm [shape: f32[2,48], index: 0, kind: input, shape index: {}, may-alias: {0,1}]
  %s1 = inlined_call_operand.hbm [shape: f32[2,48], index: 1, kind: output, shape index: {}, may-alias: {0,1}]
  %s2 = sld [smem:[#allocation0]]
  $region18: #{tpu_custom_call.1} parent=0
    _
  %s4 = ssub.s32 1, %s2
  %s5 = scalar_select 0, %s4, %s2
  $region1: #{tpu_custom_call.1} parent=0
    #allocation2 [shape = 'u8[1024]{0}', space=vmem, size = 0x400, scoped, tag = 'input window, operand 0, single buffered']
    #allocation3 [shape = 's32[1]{0}', space=sflag, size = 0x4, scoped, tag = 'scoped memory for tpu_custom_call.1']
    #allocation4 [shape = 's32[1]{0}', space=sflag, size = 0x4, scoped, tag = 'scoped memory for tpu_custom_call.1']
    #allocation5 [shape = 'u8[1024]{0}', space=vmem, size = 0x400, scoped, tag = 'output window, operand 0, single buffered']
    %6 = vsyncpa [#allocation3], 0
    %7 = vsyncpa [#allocation4], 0
    // Predicated region
    $region2: #{tpu_custom_call.1} parent=1 // pred_check
      _
    $region3: #{tpu_custom_call.1} parent=1 // pred_check_branch
      %9 = sbr.rel (0) target = $region5
    $region4: #{tpu_custom_call.1} parent=1 // pred_region
      %s11 = ssub.s32 32, 32
      %12 = vsyncadd [#allocation3], %s11
      %s14 = sshll.u32 [#allocation2], 4
      %s15 = int_to_ptr.vmem [resolvable:$true] %s14
      %17 = dma.hbm_to_vmem [thread:$0]  %s0, 32, %s15, [#allocation3]
    $region5: #{tpu_custom_call.1} parent=1 // pred_fallthru
      _
    // Predicated region
    $region6: #{tpu_custom_call.1} parent=1 // pred_check
      _
    $region7: #{tpu_custom_call.1} parent=1 // pred_check_branch
      %19 = sbr.rel (0) target = $region9
    $region8: #{tpu_custom_call.1} parent=1 // pred_region
      %20 = dma.done [#allocation3], 32
    $region9: #{tpu_custom_call.1} parent=1 // pred_fallthru
      _
    %v21 = vld [vmem:[#allocation2] sm:$0x3]
    %v22 = vlaneseq
    %v23 = vand.u32 %v22, 127
    %vm24 = vcmp.lt.s32.totalorder %v23, 0
    %v25 = vsub.s32 0, %v23
    %v26 = vsel %vm24, %v25, %v23
    %v27 = vmul.u32.u64.compose %v26, 2863311531
    %v28 = vextract.low.u32 %v27
    %v29 = vextract.high.u32 %v27
    %v30 = vshrl.u32 %v29, 2
    %v31 = vmul.u32 %v30, 6
    %v32 = vsub.s32 %v26, %v31
    %v33 = vsub.s32 0, %v32
    %v34 = vsel %vm24, %v33, %v32
    %vm35 = vcmp.ne.s32.totalorder %v34, 0
    %vm36 = vcmp.lt.s32.totalorder %v34, 0
    %vm37 = vmand %vm36, %vm35
    %v38 = vadd.s32 %v34, 6
    %v39 = vsel %vm37, %v38, %v34
    %vm40 = vcmp.lt.s32.totalorder %v39, 4
    %v41 = vsel %vm40, 4.0, 1.0
    %v42 = vmul.f32 %v21, %v41
    %vm43 = vcmask 386048
    %44 = vst.msk [vmem:[#allocation5] sm:$0x3] %vm43, %v42
    // Predicated region
    $region10: #{tpu_custom_call.1} parent=1 // pred_check
      _
    $region11: #{tpu_custom_call.1} parent=1 // pred_check_branch
      %46 = sbr.rel (0) target = $region13
    $region12: #{tpu_custom_call.1} parent=1 // pred_region
      %s48 = ssub.s32 32, 32
      %49 = vsyncadd [#allocation4], %s48
      %s51 = sshll.u32 [#allocation5], 4
      %s52 = int_to_ptr.vmem [resolvable:$true] %s51
      %54 = dma.vmem_to_hbm [thread:$0]  %s52, 32, %s1, [#allocation4]
    $region13: #{tpu_custom_call.1} parent=1 // pred_fallthru
      _
    // Predicated region
    $region14: #{tpu_custom_call.1} parent=1 // pred_check
      _
    $region15: #{tpu_custom_call.1} parent=1 // pred_check_branch
      %56 = sbr.rel (0) target = $region17
    $region16: #{tpu_custom_call.1} parent=1 // pred_region
      %57 = dma.done [#allocation4], 32
    $region17: #{tpu_custom_call.1} parent=1 // pred_fallthru
      _
    %58 = vsyncpa [#allocation3], 1
    %59 = vsyncpa [#allocation4], 1

</llo_original>
